<compile_context>
chip_gen: v6e
topology: v6e:2x2x1
jax: 0.10.0
libtpu: 0.0.40
codegen_flags: <defaults>
</compile_context>

<pallas_src>
import functools

import jax
import jax.numpy as jnp
from jax import lax
from jax.experimental import pallas as pl
from jax.experimental.pallas import tpu as pltpu


def _round_up(x: int, m: int) -> int:
    return ((x + m - 1) // m) * m


def _vmem_limit_bytes() -> int:
    cap = 64 << 20  # conservative default = v7x per-TensorCore VMEM
    try:
        cap = int(getattr(pltpu.get_tpu_info(), "vmem_capacity_bytes", cap))
    except Exception:
        pass
    # Half of physical capacity, capped at 64 MiB (v5e/v6e -> 64 MiB, v7x -> 32 MiB).
    return min(cap // 2, 64 << 20)


def _pick_tiles(n: int, c: int, hw: int, itemsize: int, budget: int):
    """Choose (bn, c_tile, hw_tile) whose lane/sublane-padded footprint fits budget."""
    LANE = 128
    SUB = 8 * max(1, 4 // itemsize)  # sublane packing for the dtype

    def pad_c(v):
        return _round_up(v, SUB)

    def pad_hw(v):
        return _round_up(v, LANE)

    c_tile, hw_tile = c, hw
    row_bytes = pad_c(c) * pad_hw(hw) * itemsize   # one batch row, padded
    bn_fit = budget // max(1, row_bytes)

    if bn_fit >= n:
        bn = n
    elif bn_fit >= 8:
        bn = (bn_fit // 8) * 8                     # keep (8,128) output-block rule
    else:
        # A sublane-legal batch group of full rows overflows the budget:
        # shrink C (128-multiples), then chunk HW (128-multiples).
        bn = min(8, n)
        if bn * row_bytes > budget and c > LANE:
            c_max = budget // (bn * pad_hw(hw) * itemsize)
            c_tile = min(c, max(LANE, (c_max // LANE) * LANE))
        if bn * pad_c(c_tile) * pad_hw(hw) * itemsize > budget:
            hw_max = budget // (bn * pad_c(c_tile) * itemsize)
            hw_tile = min(hw, max(LANE, (hw_max // LANE) * LANE))

    # v7x megacore: guarantee >= 2 independent parallel blocks at small batch.
    if pl.cdiv(n, bn) == 1 and pl.cdiv(c, c_tile) == 1 and c >= 2 * LANE:
        c_tile = _round_up(pl.cdiv(c, 2), LANE)

    return bn, c_tile, hw_tile


def _avgpool_kernel(x_ref, o_ref, acc_ref, *, inv_hw: float, hw: int, hw_tile: int):
    # x_ref: (bn, c_tile, hw_tile)   C on sublanes, HW on lanes
    # o_ref: (bn, c_tile)            lane-dense output tile
    # acc_ref: (bn, c_tile) f32 accumulator (persists across the HW grid axis)
    k = pl.program_id(2)

    @pl.when(k == 0)
    def _init():
        acc_ref[...] = jnp.zeros_like(acc_ref)

    x = x_ref[...]
    if hw % hw_tile != 0:
        # Mask the out-of-range tail of the last (partial) HW chunk.
        pos = k * hw_tile + lax.broadcasted_iota(jnp.int32, x.shape, 2)
        x = jnp.where(pos < hw, x, jnp.zeros_like(x))
    acc_ref[...] += jnp.sum(x, axis=-1, dtype=jnp.float32)   # lane/XLU reduce, f32 acc

    @pl.when(k == pl.num_programs(2) - 1)
    def _finish():
        o_ref[...] = (acc_ref[...] * inv_hw).astype(o_ref.dtype)


def resnet_neck(x: jax.Array) -> jax.Array:
    """x: (N, C, H, W) NCHW  ->  (N, C) global average pool + flatten."""
    N, C, H, W = x.shape
    HW = H * W

    # Free view of the contiguous NCHW tensor — no transpose, no copy.
    x3 = x.reshape(N, C, HW)

    itemsize = x.dtype.itemsize
    vmem_limit = _vmem_limit_bytes()
    budget = vmem_limit // 4                 # per input pipeline buffer (x2 double-buffered)

    bn, c_tile, hw_tile = _pick_tiles(N, C, HW, itemsize, budget)
    n_blocks = pl.cdiv(N, bn)
    c_blocks = pl.cdiv(C, c_tile)
    hw_blocks = pl.cdiv(HW, hw_tile)

    kernel = functools.partial(
        _avgpool_kernel, inv_hw=1.0 / float(HW), hw=HW, hw_tile=hw_tile
    )

    cost = pl.CostEstimate(
        flops=N * C * HW,
        transcendentals=0,
        bytes_accessed=N * C * HW * itemsize + N * C * itemsize,
    )

    return pl.pallas_call(
        kernel,
        out_shape=jax.ShapeDtypeStruct((N, C), x.dtype),
        grid_spec=pltpu.PrefetchScalarGridSpec(
            num_scalar_prefetch=0,
            grid=(n_blocks, c_blocks, hw_blocks),
            in_specs=[
                pl.BlockSpec((bn, c_tile, hw_tile), lambda i, j, k: (i, j, k)),
            ],
            out_specs=pl.BlockSpec((bn, c_tile), lambda i, j, k: (i, j)),
            scratch_shapes=[pltpu.VMEM((bn, c_tile), jnp.float32)],
        ),
        compiler_params=pltpu.CompilerParams(
            dimension_semantics=("parallel", "parallel", "arbitrary"),
            vmem_limit_bytes=vmem_limit,
        ),
        cost_estimate=cost,
    )(x3)


if __name__ == "__main__":
    key = jax.random.PRNGKey(0)
    N, C, H, W = 2, 4, 16, 16
    x = jax.random.normal(key, (N, C, H, W), dtype=jnp.float32)

    y = resnet_neck(x)
    jax.block_until_ready(y)

    # Reference check (matches torch AdaptiveAvgPool2d((1,1)) + flatten(1)).
    y_ref = jnp.mean(x, axis=(2, 3))
    assert y.shape == (N, C)
    assert jnp.allclose(y, y_ref, atol=1e-5, rtol=1e-5)

    print("KERNEL_OK")
</pallas_src>

<mosaic_0001>
module attributes {stable_mosaic.version = 11 : i64} {
  func.func @_avgpool_kernel(%arg0: i32, %arg1: i32, %arg2: i32, %arg3: memref<2x4x256xf32, #tpu.memory_space<vmem>>, %arg4: memref<2x4xf32, #tpu.memory_space<vmem>>, %arg5: memref<2x4xf32, #tpu.memory_space<vmem>>) attributes {dimension_semantics = [#tpu.dimension_semantics<parallel>, #tpu.dimension_semantics<parallel>, #tpu.dimension_semantics<arbitrary>], iteration_bounds = array<i64: 1, 1, 1>, scalar_prefetch = 0 : i64, scratch_operands = 1 : i64, tpu.core_type = #tpu.core_type<tc>, window_params = [{transform_indices = @transform_0, window_bounds = array<i64: 2, 4, 256>}, {transform_indices = @transform_1, window_bounds = array<i64: 2, 4>}]} {
    %c0_i32 = arith.constant 0 : i32
    %0 = arith.cmpi eq, %arg2, %c0_i32 : i32
    %1 = arith.extui %0 : i1 to i32
    %c0_i32_0 = arith.constant 0 : i32
    %2 = arith.cmpi ne, %1, %c0_i32_0 : i32
    scf.if %2 {
      %cst_9 = arith.constant 0.000000e+00 : f32
      %11 = vector.broadcast %cst_9 : f32 to vector<2x4xf32>
      %c0_10 = arith.constant 0 : index
      %c0_11 = arith.constant 0 : index
      %12 = vector.load %arg5[%c0_10, %c0_11] : memref<2x4xf32, #tpu.memory_space<vmem>>, vector<2x4xf32>
      tpu.vector_store %arg5[%c0_10, %c0_11], %11 {strides = array<i32>} : memref<2x4xf32, #tpu.memory_space<vmem>>, vector<2x4xf32>,
    } else {
    }
    %c0 = arith.constant 0 : index
    %c0_1 = arith.constant 0 : index
    %c0_2 = arith.constant 0 : index
    %3 = vector.load %arg3[%c0, %c0_1, %c0_2] : memref<2x4x256xf32, #tpu.memory_space<vmem>>, vector<2x4x256xf32>
    %c0_3 = arith.constant 0 : index
    %c0_4 = arith.constant 0 : index
    %4 = vector.load %arg5[%c0_3, %c0_4] : memref<2x4xf32, #tpu.memory_space<vmem>>, vector<2x4xf32>
    %cst = arith.constant dense<0.000000e+00> : vector<2x4xf32>
    %5 = vector.multi_reduction <add>, %3, %cst [2] : vector<2x4x256xf32> to vector<2x4xf32>
    %6 = arith.addf %4, %5 : vector<2x4xf32>
    %c0_5 = arith.constant 0 : index
    %c0_6 = arith.constant 0 : index
    %7 = vector.load %arg5[%c0_5, %c0_6] : memref<2x4xf32, #tpu.memory_space<vmem>>, vector<2x4xf32>
    tpu.vector_store %arg5[%c0_5, %c0_6], %6 {strides = array<i32>} : memref<2x4xf32, #tpu.memory_space<vmem>>, vector<2x4xf32>,
    %c0_i32_7 = arith.constant 0 : i32
    %8 = arith.cmpi eq, %arg2, %c0_i32_7 : i32
    %9 = arith.extui %8 : i1 to i32
    %c0_i32_8 = arith.constant 0 : i32
    %10 = arith.cmpi ne, %9, %c0_i32_8 : i32
    scf.if %10 {
      %c0_9 = arith.constant 0 : index
      %c0_10 = arith.constant 0 : index
      %11 = vector.load %arg5[%c0_9, %c0_10] : memref<2x4xf32, #tpu.memory_space<vmem>>, vector<2x4xf32>
      %cst_11 = arith.constant 3.906250e-03 : f32
      %12 = vector.broadcast %cst_11 : f32 to vector<2x4xf32>
      %13 = arith.mulf %11, %12 : vector<2x4xf32>
      %c0_12 = arith.constant 0 : index
      %c0_13 = arith.constant 0 : index
      %14 = vector.load %arg4[%c0_12, %c0_13] : memref<2x4xf32, #tpu.memory_space<vmem>>, vector<2x4xf32>
      tpu.vector_store %arg4[%c0_12, %c0_13], %13 {strides = array<i32>} : memref<2x4xf32, #tpu.memory_space<vmem>>, vector<2x4xf32>,
    } else {
    }
    return
  }
  func.func @transform_0(%arg0: i32, %arg1: i32, %arg2: i32) -> (i32, i32, i32) {
    %c0_i32 = arith.constant 0 : i32
    return %arg0, %arg1, %arg2 : i32, i32, i32
  }
  func.func @transform_1(%arg0: i32, %arg1: i32, %arg2: i32) -> (i32, i32) {
    %c0_i32 = arith.constant 0 : i32
    return %arg0, %arg1 : i32, i32
  }
}

</mosaic_0001>

<llo_original>
// kernel: tpu_custom_call.1
$region0: #{tpu_custom_call.1}
  #allocation0 [shape = 'u32[]', space=smem, size = 0x4, offset = 0x4, fixed_abs, tag = 'smem constant byte address 0x4 - core index']
  #allocation1 [shape = 'u32[144,128]{1,0:T(1,128)}', space=vmem, size = 0x12000, scoped, tag = 'internal scratch']
  #allocation2 [shape = 'f32[2,4]{1,0:T(2,128)}', space=vmem, size = 0x400, scoped, tag = 'scratch operand']
  %s0 = inlined_call_operand.hbm [shape: f32[2,4,256], index: 0, kind: input, shape index: {}]
  %s1 = inlined_call_operand.hbm [shape: f32[2,4], index: 1, kind: output, shape index: {}]
  %s2 = sld [smem:[#allocation0]]
  $region26: #{tpu_custom_call.1} parent=0
    _
  %s4 = ssub.s32 1, %s2
  %s5 = scalar_select 0, %s4, %s2
  $region1: #{tpu_custom_call.1} parent=0
    #allocation3 [shape = 'u8[8192]{0}', space=vmem, size = 0x2000, scoped, tag = 'input window, operand 0, single buffered']
    #allocation4 [shape = 's32[1]{0}', space=sflag, size = 0x4, scoped, tag = 'scoped memory for tpu_custom_call.1']
    #allocation5 [shape = 's32[1]{0}', space=sflag, size = 0x4, scoped, tag = 'scoped memory for tpu_custom_call.1']
    #allocation6 [shape = 'u8[1024]{0}', space=vmem, size = 0x400, scoped, tag = 'output window, operand 0, single buffered']
    %6 = vsyncpa [#allocation4], 0
    %7 = vsyncpa [#allocation5], 0
    // Predicated region
    $region2: #{tpu_custom_call.1} parent=1 // pred_check
      _
    $region3: #{tpu_custom_call.1} parent=1 // pred_check_branch
      %9 = sbr.rel (0) target = $region5
    $region4: #{tpu_custom_call.1} parent=1 // pred_region
      %s11 = ssub.s32 256, 256
      %12 = vsyncadd [#allocation4], %s11
      %s13 = sshll.u32 [#allocation3], 4
      %s14 = int_to_ptr.vmem [resolvable:$true] %s13
      %19 = dma.hbm_to_vmem [thread:$0]  %s0, 256, %s14, [#allocation4], 128, 128, 8
    $region5: #{tpu_custom_call.1} parent=1 // pred_fallthru
      _
    // Predicated region
    $region6: #{tpu_custom_call.1} parent=1 // pred_check
      _
    $region7: #{tpu_custom_call.1} parent=1 // pred_check_branch
      %21 = sbr.rel (0) target = $region9
    $region8: #{tpu_custom_call.1} parent=1 // pred_region
      %22 = dma.done [#allocation4], 256
    $region9: #{tpu_custom_call.1} parent=1 // pred_fallthru
      _
    %p23 = scmp.eq.s32.totalorder 0, 0
    // Predicated region
    $region10: #{tpu_custom_call.1} parent=1 // pred_check
      %p24 = pneg %p23
    $region11: #{tpu_custom_call.1} parent=1 // pred_check_branch
      %26 = sbr.rel (%p24) target = $region13
    $region12: #{tpu_custom_call.1} parent=1 // pred_region
      %vm27 = vcmask 25600
      %28 = vst.msk [vmem:[#allocation2] sm:$0x3] %vm27, 0.0
    $region13: #{tpu_custom_call.1} parent=1 // pred_fallthru
      _
    %v29 = vld [vmem:[#allocation3] sm:$0xff]
    %v30 = vld [vmem:[#allocation3 + $0x8] sm:$0xff]
    %v31 = vld [vmem:[#allocation2] sm:$0x3]
    %v34 = vcombine.high %v29, %v29
    %v35 = vcombine.high %v30, %v30
    %vm38 = vcmask 1043456
    %v39 = vsel %vm38, %v29, 0.0
    %v40 = vsel %vm38, %v34, 0.0
    %v41 = vadd.f32 %v39, %v40
    %42 = vadd.xlane.f32.xlu0 %v41
    %v43 = vpop.xlane.xlu0 %42
    %v44 = vsel %vm38, %v30, 0.0
    %v45 = vsel %vm38, %v35, 0.0
    %v46 = vadd.f32 %v44, %v45
    %47 = vadd.xlane.f32.xlu0 %v46
    %v48 = vpop.xlane.xlu0 %47
    %v51 = vlaneseq
    %v52 = vand.u32 %v51, 127
    %v53 = vlaneseq
    %v54 = vshrl.u32 %v53, 7
    %v55 = vsub.s32 %v52, %v54
    %v56 = vrot.slane %v43, %v55
    %v57 = vlaneseq
    %v58 = vshrl.u32 %v57, 7
    %v59 = vsub.s32 %v52, %v58
    %v60 = vrot.slane %v48, %v59
    %vm61 = vcmask 1041409
    %v62 = vsel %vm61, %v60, %v56
    %v64 = vadd.f32 %v31, %v62
    %vm65 = vcmask 25600
    %66 = vst.msk [vmem:[#allocation2] sm:$0x3] %vm65, %v64
    // Predicated region
    $region14: #{tpu_custom_call.1} parent=1 // pred_check
      %p67 = pneg %p23
    $region15: #{tpu_custom_call.1} parent=1 // pred_check_branch
      %69 = sbr.rel (%p67) target = $region17
    $region16: #{tpu_custom_call.1} parent=1 // pred_region
      %v70 = vld [vmem:[#allocation2] sm:$0x3]
      %v71 = vmul.f32 %v70, 0.00390625
      %72 = vst.msk [vmem:[#allocation6] sm:$0x3] %vm65, %v71
    $region17: #{tpu_custom_call.1} parent=1 // pred_fallthru
      _
    // Predicated region
    $region18: #{tpu_custom_call.1} parent=1 // pred_check
      _
    $region19: #{tpu_custom_call.1} parent=1 // pred_check_branch
      %74 = sbr.rel (0) target = $region21
    $region20: #{tpu_custom_call.1} parent=1 // pred_region
      %s76 = ssub.s32 32, 32
      %77 = vsyncadd [#allocation5], %s76
      %s79 = sshll.u32 [#allocation6], 4
      %s80 = int_to_ptr.vmem [resolvable:$true] %s79
      %82 = dma.vmem_to_hbm [thread:$0]  %s80, 32, %s1, [#allocation5]
    $region21: #{tpu_custom_call.1} parent=1 // pred_fallthru
      _
    // Predicated region
    $region22: #{tpu_custom_call.1} parent=1 // pred_check
      _
    $region23: #{tpu_custom_call.1} parent=1 // pred_check_branch
      %84 = sbr.rel (0) target = $region25
    $region24: #{tpu_custom_call.1} parent=1 // pred_region
      %85 = dma.done [#allocation5], 32
    $region25: #{tpu_custom_call.1} parent=1 // pred_fallthru
      _
    %86 = vsyncpa [#allocation4], 1
    %87 = vsyncpa [#allocation5], 1

</llo_original>
